<compile_context>
chip_gen: v7x
topology: tpu7x:2x2x1
jax: 0.10.0
libtpu: 0.0.40
codegen_flags: <defaults>
</compile_context>

<pallas_src>
import functools

import jax
import jax.numpy as jnp
from jax.experimental import pallas as pl
from jax.experimental.pallas import tpu as pltpu


def _feature_attn_kernel(scale, x_ref, q_ref, z_ref, a_ref):
    """One batch-tile of FeatureEmbAttention.

    x_ref : (TB, S, D) f32   input features
    q_ref : (1, D)     f32   query vector (row layout, lane-dense)
    z_ref : (TB, D)    f32   attended output
    a_ref : (TB, S)    f32   softmax attention weights
    """
    x = x_ref[...]                                   # (TB, S, D)
    q = q_ref[...]                                   # (1, D)

    # --- scaled dot-product logits: contract over D on the VPU (lane reduce) ---
    xs = x * scale                                   # (TB, S, D)
    qs = q * scale                                   # (1, D)
    logits = jnp.sum(xs * qs[:, None, :], axis=-1)   # (TB, S)

    # --- numerically-stable softmax over the sequence axis ---
    m = jnp.max(logits, axis=-1, keepdims=True)      # (TB, 1)
    e = jnp.exp(logits - m)                          # (TB, S)
    denom = jnp.sum(e, axis=-1, keepdims=True)       # (TB, 1)
    p = e / denom                                    # (TB, S)

    # --- weighted sum of the (unscaled) features: contract over S (sublane reduce) ---
    z = jnp.sum(p[:, :, None] * x, axis=1)           # (TB, D)

    z_ref[...] = z.astype(z_ref.dtype)
    a_ref[...] = p.astype(a_ref.dtype)


def _pick_block_b(batch: int, target: int = 128) -> int:
    """Largest batch tile that divides B and keeps the (8,128) block rules happy."""
    if batch <= 8:
        return batch
    cap = min(target, batch)
    cand = cap - (cap % 8)
    while cand >= 8:
        if batch % cand == 0:
            return cand
        cand -= 8
    return batch  # fall back to the full batch (always layout-legal)


@functools.partial(jax.jit, static_argnames=("block_b",))
def feature_emb_attention(x, queryv, block_b=None):
    """Pallas implementation of FeatureEmbAttention.forward.

    x:       (B, S, D) float32
    queryv:  (D,)      float32
    returns: (z, attn_weights) with shapes (B, D) and (B, S)
    """
    batch, seq, dim = x.shape
    assert queryv.shape == (dim,)

    tb = block_b if block_b is not None else _pick_block_b(batch)
    assert batch % tb == 0, f"batch tile {tb} must divide batch {batch}"
    grid = (batch // tb,)

    scale = float(dim) ** -0.25
    kernel = functools.partial(_feature_attn_kernel, scale)

    q2d = queryv.reshape(1, dim)  # lane-dense row layout for the query

    z, attn = pl.pallas_call(
        kernel,
        out_shape=(
            jax.ShapeDtypeStruct((batch, dim), jnp.float32),  # z
            jax.ShapeDtypeStruct((batch, seq), jnp.float32),  # attn weights
        ),
        grid=grid,
        in_specs=[
            pl.BlockSpec((tb, seq, dim), lambda i: (i, 0, 0)),  # X batch tile
            pl.BlockSpec((1, dim), lambda i: (0, 0)),           # query (replicated)
        ],
        out_specs=(
            pl.BlockSpec((tb, dim), lambda i: (i, 0)),
            pl.BlockSpec((tb, seq), lambda i: (i, 0)),
        ),
        compiler_params=pltpu.CompilerParams(
            dimension_semantics=("parallel",),
        ),
    )(x, q2d)
    return z, attn


def reference(x, queryv):
    """Pure-JAX mirror of the PyTorch forward."""
    dim = x.shape[-1]
    scale = float(dim) ** -0.25
    logits = jnp.einsum("bsd,d->bs", x * scale, queryv * scale)
    p = jax.nn.softmax(logits, axis=1)
    z = jnp.einsum("bs,bsd->bd", p, x)
    return z, p


if __name__ == "__main__":
    # Small shapes consistent with the module: batch=2, seqlen=8, input_dim=32.
    batch, seqlen, input_dim = 2, 8, 32

    key = jax.random.PRNGKey(0)
    k_x, k_q = jax.random.split(key)
    X = jax.random.normal(k_x, (batch, seqlen, input_dim), jnp.float32)
    queryv = jax.random.normal(k_q, (input_dim,), jnp.float32)

    z, attn = feature_emb_attention(X, queryv)
    (z, attn) = jax.block_until_ready((z, attn))

    z_ref, attn_ref = reference(X, queryv)
    assert z.shape == (batch, input_dim), (z.shape, (batch, input_dim))
    assert attn.shape == (batch, seqlen), (attn.shape, (batch, seqlen))
    assert jnp.allclose(attn, attn_ref, atol=1e-5, rtol=1e-5), "attn mismatch vs reference"
    assert jnp.allclose(z, z_ref, atol=1e-5, rtol=1e-5), "z mismatch vs reference"
    # Softmax rows must sum to 1.
    assert jnp.allclose(jnp.sum(attn, axis=1), jnp.ones((batch,)), atol=1e-5)

    print("KERNEL_OK")
</pallas_src>

<mosaic_0001>
module attributes {stable_mosaic.version = 11 : i64} {
  func.func @_feature_attn_kernel(%arg0: i32, %arg1: memref<2x8x32xf32, #tpu.memory_space<vmem>>, %arg2: memref<1x32xf32, #tpu.memory_space<vmem>>, %arg3: memref<2x32xf32, #tpu.memory_space<vmem>>, %arg4: memref<2x8xf32, #tpu.memory_space<vmem>>) attributes {dimension_semantics = [#tpu.dimension_semantics<parallel>], iteration_bounds = array<i64: 1>, scalar_prefetch = 0 : i64, scratch_operands = 0 : i64, tpu.core_type = #tpu.core_type<tc>, window_params = [{transform_indices = @transform_0, window_bounds = array<i64: 2, 8, 32>}, {pipeline_mode = #tpu.pipeline_mode<synchronous>, transform_indices = @transform_1, window_bounds = array<i64: 1, 32>}, {transform_indices = @transform_2, window_bounds = array<i64: 2, 32>}, {transform_indices = @transform_3, window_bounds = array<i64: 2, 8>}]} {
    %c0 = arith.constant 0 : index
    %c0_0 = arith.constant 0 : index
    %c0_1 = arith.constant 0 : index
    %0 = vector.load %arg1[%c0, %c0_0, %c0_1] : memref<2x8x32xf32, #tpu.memory_space<vmem>>, vector<2x8x32xf32>
    %c0_2 = arith.constant 0 : index
    %c0_3 = arith.constant 0 : index
    %1 = vector.load %arg2[%c0_2, %c0_3] : memref<1x32xf32, #tpu.memory_space<vmem>>, vector<1x32xf32>
    %cst = arith.constant 0.420448214 : f32
    %2 = vector.broadcast %cst : f32 to vector<2x8x32xf32>
    %3 = arith.mulf %0, %2 : vector<2x8x32xf32>
    %cst_4 = arith.constant 0.420448214 : f32
    %4 = vector.broadcast %cst_4 : f32 to vector<1x32xf32>
    %5 = arith.mulf %1, %4 : vector<1x32xf32>
    %6 = vector.shape_cast %5 : vector<1x32xf32> to vector<1x1x32xf32>
    %7 = vector.broadcast %6 : vector<1x1x32xf32> to vector<2x8x32xf32>
    %8 = arith.mulf %3, %7 : vector<2x8x32xf32>
    %cst_5 = arith.constant dense<0.000000e+00> : vector<2x8xf32>
    %9 = vector.multi_reduction <add>, %8, %cst_5 [2] : vector<2x8x32xf32> to vector<2x8xf32>
    %cst_6 = arith.constant dense<0xFF800000> : vector<2xf32>
    %10 = vector.multi_reduction <maximumf>, %9, %cst_6 [1] : vector<2x8xf32> to vector<2xf32>
    %11 = vector.shape_cast %10 : vector<2xf32> to vector<2x1xf32>
    %12 = vector.broadcast %11 : vector<2x1xf32> to vector<2x8xf32>
    %13 = arith.subf %9, %12 : vector<2x8xf32>
    %14 = math.exp %13 : vector<2x8xf32>
    %cst_7 = arith.constant dense<0.000000e+00> : vector<2xf32>
    %15 = vector.multi_reduction <add>, %14, %cst_7 [1] : vector<2x8xf32> to vector<2xf32>
    %16 = vector.shape_cast %15 : vector<2xf32> to vector<2x1xf32>
    %17 = vector.broadcast %16 : vector<2x1xf32> to vector<2x8xf32>
    %18 = arith.divf %14, %17 : vector<2x8xf32>
    %19 = vector.shape_cast %18 : vector<2x8xf32> to vector<2x8x1xf32>
    %20 = vector.broadcast %19 : vector<2x8x1xf32> to vector<2x8x32xf32>
    %21 = arith.mulf %20, %0 : vector<2x8x32xf32>
    %cst_8 = arith.constant dense<0.000000e+00> : vector<2x32xf32>
    %22 = vector.multi_reduction <add>, %21, %cst_8 [1] : vector<2x8x32xf32> to vector<2x32xf32>
    %c0_9 = arith.constant 0 : index
    %c0_10 = arith.constant 0 : index
    %23 = vector.load %arg3[%c0_9, %c0_10] : memref<2x32xf32, #tpu.memory_space<vmem>>, vector<2x32xf32>
    tpu.vector_store %arg3[%c0_9, %c0_10], %22 {strides = array<i32>} : memref<2x32xf32, #tpu.memory_space<vmem>>, vector<2x32xf32>,
    %c0_11 = arith.constant 0 : index
    %c0_12 = arith.constant 0 : index
    %24 = vector.load %arg4[%c0_11, %c0_12] : memref<2x8xf32, #tpu.memory_space<vmem>>, vector<2x8xf32>
    tpu.vector_store %arg4[%c0_11, %c0_12], %18 {strides = array<i32>} : memref<2x8xf32, #tpu.memory_space<vmem>>, vector<2x8xf32>,
    return
  }
  func.func @transform_0(%arg0: i32) -> (i32, i32, i32) {
    %c0_i32 = arith.constant 0 : i32
    %c0_i32_0 = arith.constant 0 : i32
    %c0_i32_1 = arith.constant 0 : i32
    return %arg0, %c0_i32, %c0_i32_0 : i32, i32, i32
  }
  func.func @transform_1(%arg0: i32) -> (i32, i32) {
    %c0_i32 = arith.constant 0 : i32
    %c0_i32_0 = arith.constant 0 : i32
    %c0_i32_1 = arith.constant 0 : i32
    return %c0_i32, %c0_i32_0 : i32, i32
  }
  func.func @transform_2(%arg0: i32) -> (i32, i32) {
    %c0_i32 = arith.constant 0 : i32
    %c0_i32_0 = arith.constant 0 : i32
    return %arg0, %c0_i32 : i32, i32
  }
  func.func @transform_3(%arg0: i32) -> (i32, i32) {
    %c0_i32 = arith.constant 0 : i32
    %c0_i32_0 = arith.constant 0 : i32
    return %arg0, %c0_i32 : i32, i32
  }
}

</mosaic_0001>

<llo_original>
// kernel: feature_emb_attention.1
$region0: #{feature_emb_attention.1}
  #allocation0 [shape = 'u32[]', space=smem, size = 0x4, offset = 0x4, fixed_abs, tag = 'smem constant byte address 0x4 - core index']
  #allocation1 [shape = 'u32[144,128]{1,0:T(1,128)}', space=vmem, size = 0x12000, scoped, tag = 'internal scratch']
  %s0 = inlined_call_operand.hbm [shape: f32[2,8,32], index: 0, kind: input, shape index: {}]
  %s1 = inlined_call_operand.vmem [shape: f32[1,32], index: 1, kind: input, shape index: {}]
  %s2 = inlined_call_operand.hbm [shape: f32[2,32], index: 2, kind: output, shape index: {0}]
  %s3 = inlined_call_operand.hbm [shape: f32[2,8], index: 3, kind: output, shape index: {1}]
  %4 = xla_tuple %s2, %s3
  %s5 = sld [smem:[#allocation0]]
  $region30: #{feature_emb_attention.1} parent=0
    _
  %s7 = ssub.s32 1, %s5
  %s8 = scalar_select 0, %s7, %s5
  $region1: #{feature_emb_attention.1} parent=0
    #allocation2 [shape = 'u8[8192]{0}', space=vmem, size = 0x2000, scoped, tag = 'input window, operand 0, single buffered']
    #allocation3 [shape = 's32[1]{0}', space=sflag, size = 0x4, scoped, tag = 'scoped memory for feature_emb_attention.1']
    #allocation4 [shape = 's32[1]{0}', space=sflag, size = 0x4, scoped, tag = 'scoped memory for feature_emb_attention.1']
    #allocation5 [shape = 'u8[1024]{0}', space=vmem, size = 0x400, scoped, tag = 'output window, operand 0, single buffered']
    #allocation6 [shape = 'u8[1024]{0}', space=vmem, size = 0x400, scoped, tag = 'output window, operand 1, single buffered']
    #allocation7 [shape = 's32[1]{0}', space=sflag, size = 0x4, scoped, tag = 'scoped memory for feature_emb_attention.1']
    %9 = vsyncpa [#allocation3], 0
    %10 = vsyncpa [#allocation4], 0
    %11 = vsyncpa [#allocation7], 0
    // Predicated region
    $region2: #{feature_emb_attention.1} parent=1 // pred_check
      _
    $region3: #{feature_emb_attention.1} parent=1 // pred_check_branch
      %13 = sbr.rel (0) target = $region5
    $region4: #{feature_emb_attention.1} parent=1 // pred_region
      %s15 = ssub.s32 256, 256
      %16 = vsyncadd [#allocation3], %s15
      %s17 = sshll.u32 [#allocation2], 4
      %s18 = int_to_ptr.vmem [resolvable:$true] %s17
      %23 = dma.hbm_to_vmem [thread:$0]  %s0, 256, %s18, [#allocation3], 128, 128, 8
    $region5: #{feature_emb_attention.1} parent=1 // pred_fallthru
      _
    // Predicated region
    $region6: #{feature_emb_attention.1} parent=1 // pred_check
      _
    $region7: #{feature_emb_attention.1} parent=1 // pred_check_branch
      %25 = sbr.rel (0) target = $region9
    $region8: #{feature_emb_attention.1} parent=1 // pred_region
      _
    $region9: #{feature_emb_attention.1} parent=1 // pred_fallthru
      _
    // Predicated region
    $region10: #{feature_emb_attention.1} parent=1 // pred_check
      _
    $region11: #{feature_emb_attention.1} parent=1 // pred_check_branch
      %27 = sbr.rel (0) target = $region13
    $region12: #{feature_emb_attention.1} parent=1 // pred_region
      %28 = dma.done [#allocation3], 256
    $region13: #{feature_emb_attention.1} parent=1 // pred_fallthru
      _
    %v29 = vld [vmem:[#allocation2] sm:$0xff]
    %v30 = vld [vmem:[#allocation2 + $0x8] sm:$0xff]
    %v31 = vld [vmem:[%s1] sm:$0x1]
    %v32 = vmul.f32 %v29, 0.4204482
    %v33 = vmul.f32 %v30, 0.4204482
    %v34 = vmul.f32 %v31, 0.4204482
    %v36 = vlaneseq
    %v37 = vshrl.u32 %v36, 7
    %v38 = vsub.s32 0, %v37
    %v39 = vrot.slane %v34, %v38
    %v41 = vmul.f32 %v32, %v39
    %v42 = vmul.f32 %v33, %v39
    %vm43 = vcmask 261120
    %v44 = vsel %vm43, %v41, 0.0
    %45 = vadd.xlane.f32.xlu0 %v44
    %v46 = vpop.xlane.xlu0 %45
    %v47 = vsel %vm43, %v42, 0.0
    %48 = vadd.xlane.f32.xlu0 %v47
    %v49 = vpop.xlane.xlu0 %48
    %v52 = vlaneseq
    %v53 = vand.u32 %v52, 127
    %v54 = vlaneseq
    %v55 = vshrl.u32 %v54, 7
    %v56 = vsub.s32 %v53, %v55
    %v57 = vrot.slane %v46, %v56
    %v58 = vlaneseq
    %v59 = vshrl.u32 %v58, 7
    %v60 = vsub.s32 %v53, %v59
    %v61 = vrot.slane %v49, %v60
    %vm62 = vcmask 1041409
    %v63 = vsel %vm62, %v61, %v57
    %vm65 = vcmask 58368
    %v66 = vsel %vm65, %v63, -inf
    %67 = vmax.xlane.f32.xlu0 %v66
    %v68 = vpop.xlane.xlu0 %67
    %v70 = vlaneseq
    %v71 = vshrl.u32 %v70, 7
    %v72 = vsub.s32 0, %v71
    %v73 = vrot.slane %v68, %v72
    %v74 = vlaneseq
    %v75 = vshrl.u32 %v74, 7
    %v76 = vsub.s32 1, %v75
    %v77 = vrot.slane %v68, %v76
    %v80 = vsub.f32 %v46, %v73
    %v81 = vsub.f32 %v49, %v77
    %v82 = vmul.f32 %v80, 1.442695
    %v83 = vpow.pop %v82
    %v84 = vmul.f32 %v81, 1.442695
    %v85 = vpow.pop %v84
    %88 = vset.pattern.permute.xlu0 0
    %89 = vperm.xlu0 %88, %v83
    %v90 = vpop.permute.xlu0 %89
    %91 = vset.pattern.permute.xlu0 0
    %92 = vperm.xlu0 %91, %v85
    %v93 = vpop.permute.xlu0 %92
    %v94 = vlaneseq
    %v95 = vshrl.u32 %v94, 7
    %v96 = vsub.s32 %v53, %v95
    %v97 = vrot.slane %v90, %v96
    %v98 = vlaneseq
    %v99 = vshrl.u32 %v98, 7
    %v100 = vsub.s32 %v53, %v99
    %v101 = vrot.slane %v93, %v100
    %v102 = vsel %vm62, %v101, %v97
    %v104 = vsel %vm65, %v102, 0.0
    %105 = vadd.xlane.f32.xlu0 %v104
    %v106 = vpop.xlane.xlu0 %105
    %v108 = vlaneseq
    %v109 = vshrl.u32 %v108, 7
    %v110 = vsub.s32 0, %v109
    %v111 = vrot.slane %v106, %v110
    %v112 = vlaneseq
    %v113 = vshrl.u32 %v112, 7
    %v114 = vsub.s32 1, %v113
    %v115 = vrot.slane %v106, %v114
    %v118 = vrcp.pop %v111
    %v119 = vmul.f32 %v83, %v118
    %v120 = vrcp.pop %v115
    %v121 = vmul.f32 %v85, %v120
    %123 = vset.pattern.permute.xlu0 0
    %124 = vperm.xlu0 %123, %v119
    %v125 = vpop.permute.xlu0 %124
    %128 = vset.pattern.permute.xlu0 0
    %129 = vperm.xlu0 %128, %v121
    %v130 = vpop.permute.xlu0 %129
    %v132 = vmul.f32 %v125, %v29
    %v133 = vmul.f32 %v130, %v30
    %v134 = vsel %vm43, %v132, 0.0
    %v135 = vrot.slane %v134, 4
    %v136 = vadd.f32 %v134, %v135
    %v137 = vrot.slane %v136, 2
    %v138 = vadd.f32 %v136, %v137
    %v139 = vrot.slane %v138, 1
    %v140 = vadd.f32 %v138, %v139
    %v141 = vsel %vm43, %v133, 0.0
    %v142 = vrot.slane %v141, 4
    %v143 = vadd.f32 %v141, %v142
    %v144 = vrot.slane %v143, 2
    %v145 = vadd.f32 %v143, %v144
    %v146 = vrot.slane %v145, 1
    %v147 = vadd.f32 %v145, %v146
    %v150 = vsel %vm62, %v147, %v140
    %vm152 = vcmask 254976
    %153 = vst.msk [vmem:[#allocation5] sm:$0x3] %vm152, %v150
    %v154 = vlaneseq
    %v155 = vshrl.u32 %v154, 7
    %v156 = vsub.s32 %v53, %v155
    %v157 = vrot.slane %v125, %v156
    %v158 = vlaneseq
    %v159 = vshrl.u32 %v158, 7
    %v160 = vsub.s32 %v53, %v159
    %v161 = vrot.slane %v130, %v160
    %v162 = vsel %vm62, %v161, %v157
    %164 = vst.msk [vmem:[#allocation6] sm:$0x3] %vm65, %v162
    // Predicated region
    $region14: #{feature_emb_attention.1} parent=1 // pred_check
      _
    $region15: #{feature_emb_attention.1} parent=1 // pred_check_branch
      %166 = sbr.rel (0) target = $region17
    $region16: #{feature_emb_attention.1} parent=1 // pred_region
      %s168 = ssub.s32 32, 32
      %169 = vsyncadd [#allocation4], %s168
      %s171 = sshll.u32 [#allocation5], 4
      %s172 = int_to_ptr.vmem [resolvable:$true] %s171
      %174 = dma.vmem_to_hbm [thread:$0]  %s172, 32, %s2, [#allocation4]
    $region17: #{feature_emb_attention.1} parent=1 // pred_fallthru
      _
    // Predicated region
    $region18: #{feature_emb_attention.1} parent=1 // pred_check
      _
    $region19: #{feature_emb_attention.1} parent=1 // pred_check_branch
      %176 = sbr.rel (0) target = $region21
    $region20: #{feature_emb_attention.1} parent=1 // pred_region
      %s178 = ssub.s32 32, 32
      %179 = vsyncadd [#allocation7], %s178
      %s181 = sshll.u32 [#allocation6], 4
      %s182 = int_to_ptr.vmem [resolvable:$true] %s181
      %184 = dma.vmem_to_hbm [thread:$0]  %s182, 32, %s3, [#allocation7]
    $region21: #{feature_emb_attention.1} parent=1 // pred_fallthru
      _
    // Predicated region
    $region22: #{feature_emb_attention.1} parent=1 // pred_check
      _
    $region23: #{feature_emb_attention.1} parent=1 // pred_check_branch
      %186 = sbr.rel (0) target = $region25
    $region24: #{feature_emb_attention.1} parent=1 // pred_region
      %187 = dma.done [#allocation4], 32
    $region25: #{feature_emb_attention.1} parent=1 // pred_fallthru
      _
    // Predicated region
    $region26: #{feature_emb_attention.1} parent=1 // pred_check
      _
    $region27: #{feature_emb_attention.1} parent=1 // pred_check_branch
      %189 = sbr.rel (0) target = $region29
    $region28: #{feature_emb_attention.1} parent=1 // pred_region
      %190 = dma.done [#allocation7], 32
    $region29: #{feature_emb_attention.1} parent=1 // pred_fallthru
      _
    %191 = vsyncpa [#allocation3], 1
    %192 = vsyncpa [#allocation4], 1
    %193 = vsyncpa [#allocation7], 1

</llo_original>
